<compile_context>
chip_gen: v6e
topology: v6e:2x2x1
jax: 0.10.0
libtpu: 0.0.40
codegen_flags: <defaults>
</compile_context>

<pallas_src>
import jax
import jax.numpy as jnp
from jax.experimental import pallas as pl
from jax.experimental.pallas import tpu as pltpu

# Small, CIFAR-like shapes (consistent with the module's intended use).
B, C, H, W = 2, 4, 16, 16
KH = KW = 3
HIDDEN = 32
NUM_CLASSES = 10

M = H * W                 # 256 spatial positions per image
BM = B * M                # 512 collapsed (batch * spatial) rows
K = C * KH * KW           # 36  im2col feature dim
KPAD = 128                # lane-padded contraction dim (unmasked MXU feed)
HPAD = 128                # lane-padded hidden dim (unmasked bias/ReLU/pool)
NPAD = 128                # lane-padded logits dim (lane-dense single store)
BPAD = 8                  # sublane-padded batch dim (unmasked output store)


def cnn_head_kernel(p_ref, pool_ref, w1_ref, b1_ref, w2_ref, b2_ref, o_ref):
    """Fused conv(im2col matmul) + bias + ReLU + global-avg-pool + classifier.

    p_ref   : (BM, KPAD)     im2col patches, K zero-padded to 128 lanes
    pool_ref: (BPAD, BM)     constant block-averaging matrix (1/M baked in)
    w1_ref  : (KPAD, HPAD)   conv weight, zero-padded rows and cols
    b1_ref  : (1, HPAD)
    w2_ref  : (HPAD, NPAD)   classifier weight, zero-padded rows and cols
    b2_ref  : (1, NPAD)
    o_ref   : (BPAD, NPAD)   sublane/lane-dense padded logits
    """
    # One conv matmul for the whole batch; all tiles are unmasked 128-lane.
    feat = jnp.dot(p_ref[...], w1_ref[...],
                   preferred_element_type=jnp.float32)             # (BM, HPAD)
    feat = jnp.maximum(feat + b1_ref[...], 0.0)                     # bias + ReLU

    # Global average pool over each image's M rows via a constant (BPAD, BM)
    # averaging matrix on the MXU (no reshape, no cross-sublane reduction,
    # no per-call iota/select work).
    pooled = jnp.dot(pool_ref[...], feat,
                     preferred_element_type=jnp.float32)            # (BPAD, HPAD)

    # Single classifier matmul; single unmasked full-block store.
    o_ref[...] = jnp.dot(pooled, w2_ref[...],
                         preferred_element_type=jnp.float32) + b2_ref[...]


def forward_pallas(patches, pool, w1p, b1p, w2p, b2p):
    # No grid: whole arrays live in VMEM, single kernel invocation, no
    # double-buffering / pipeline bookkeeping (total footprint < 1 MB).
    return pl.pallas_call(
        cnn_head_kernel,
        out_shape=jax.ShapeDtypeStruct((BPAD, NPAD), jnp.float32),
        in_specs=[pl.BlockSpec(memory_space=pltpu.MemorySpace.VMEM)] * 6,
        out_specs=pl.BlockSpec(memory_space=pltpu.MemorySpace.VMEM),
    )(patches, pool, w1p, b1p, w2p, b2p)


def im2col_padded(x_nhwc):
    """3x3 / stride 1 / pad 1 patches, lane-padded to KPAD in one concat.

    Output (B*H*W, KPAD); feature order (dy, dx, C), zeros in lanes [K:KPAD).
    """
    b, h, w, c = x_nhwc.shape
    xp = jnp.pad(x_nhwc, ((0, 0), (1, 1), (1, 1), (0, 0)))
    cols = [xp[:, dy:dy + h, dx:dx + w, :]
            for dy in range(KH) for dx in range(KW)]
    # Fuse the K -> KPAD lane pad into the same concatenate so XLA writes the
    # patches array exactly once.
    cols.append(jnp.zeros((b, h, w, KPAD - K), jnp.float32))
    return jnp.concatenate(cols, axis=-1).reshape(b * h * w, KPAD)


@jax.jit
def _model_forward(x_nchw, pool, w1p, b1p, w2p, b2p):
    x = jnp.transpose(x_nchw, (0, 2, 3, 1)).astype(jnp.float32)     # NCHW -> NHWC
    patches = im2col_padded(x)                                      # (BM, KPAD)
    logits_padded = forward_pallas(patches, pool, w1p, b1p, w2p, b2p)  # (8, 128)
    return logits_padded[:B, :NUM_CLASSES]                          # (B, 10)


class ModelWrapperPallas:
    """JAX/Pallas analogue of the PyTorch ModelWrapper (midloop=False path)."""

    def __init__(self, key):
        k1, k2, k3, k4 = jax.random.split(key, 4)
        # Deterministic synthetic parameters (conv weight stored HWIO).
        self.w_conv = 0.1 * jax.random.normal(k1, (KH, KW, C, HIDDEN), jnp.float32)
        self.b_conv = 0.1 * jax.random.normal(k2, (HIDDEN,), jnp.float32)
        self.w_fc = 0.1 * jax.random.normal(k3, (HIDDEN, NUM_CLASSES), jnp.float32)
        self.b_fc = 0.1 * jax.random.normal(k4, (NUM_CLASSES,), jnp.float32)
        self.midloop = False

        # Pre-pad parameters once (hoisted out of the per-call path).
        self._w1p = jnp.pad(self.w_conv.reshape(K, HIDDEN),
                            ((0, KPAD - K), (0, HPAD - HIDDEN)))
        self._b1p = jnp.pad(self.b_conv.reshape(1, HIDDEN),
                            ((0, 0), (0, HPAD - HIDDEN)))
        self._w2p = jnp.pad(self.w_fc,
                            ((0, HPAD - HIDDEN), (0, NPAD - NUM_CLASSES)))
        self._b2p = jnp.pad(self.b_fc.reshape(1, NUM_CLASSES),
                            ((0, 0), (0, NPAD - NUM_CLASSES)))

        # Precompute the (BPAD, BM) block-averaging pooling matrix once
        # (rows >= B are zero; 1/M baked in so there is no runtime divide).
        img_id = jnp.arange(BPAD)[:, None]
        row_id = jnp.arange(BM)[None, :]
        in_img = (img_id < B) & (row_id >= img_id * M) & (row_id < (img_id + 1) * M)
        self._pool = jnp.where(in_img, 1.0 / M, 0.0).astype(jnp.float32)

    def __call__(self, x, *args, **kwargs):
        output = _model_forward(x, self._pool, self._w1p, self._b1p,
                                self._w2p, self._b2p)
        if self.midloop:
            return output
        # Mirrors the PyTorch wrapper's `if len(output) == 1: output = output[0]`
        # (a no-op for batch size > 1; fragile for B == 1, kept for parity).
        if len(output) == 1:
            output = output[0]
        return {'last_logits': output}


def _reference(x_nchw, wrapper):
    """Pure-JAX reference for the same math (sanity check only)."""
    x = jnp.transpose(x_nchw, (0, 2, 3, 1)).astype(jnp.float32)
    patches = im2col_padded(x)[:, :K]                               # (BM, K)
    feat = jnp.maximum(patches @ wrapper.w_conv.reshape(K, HIDDEN)
                       + wrapper.b_conv[None, :], 0.0)
    pooled = feat.reshape(B, M, HIDDEN).mean(axis=1)
    return pooled @ wrapper.w_fc + wrapper.b_fc[None, :]


if __name__ == "__main__":
    key = jax.random.PRNGKey(0)
    kx, kp = jax.random.split(key)
    x = jax.random.normal(kx, (B, C, H, W), jnp.float32)   # NCHW, like PyTorch input

    wrapper = ModelWrapperPallas(kp)
    out = wrapper(x)
    logits = out['last_logits']
    jax.block_until_ready(logits)

    ref = _reference(x, wrapper)
    assert logits.shape == (B, NUM_CLASSES)
    assert jnp.allclose(logits, ref, atol=1e-4, rtol=1e-4)

    print("KERNEL_OK")
</pallas_src>

<mosaic_0001>
module attributes {stable_mosaic.version = 11 : i64} {
  func.func @cnn_head_kernel(%arg0: memref<512x128xf32, #tpu.memory_space<vmem>>, %arg1: memref<8x512xf32, #tpu.memory_space<vmem>>, %arg2: memref<128x128xf32, #tpu.memory_space<vmem>>, %arg3: memref<1x128xf32, #tpu.memory_space<vmem>>, %arg4: memref<128x128xf32, #tpu.memory_space<vmem>>, %arg5: memref<1x128xf32, #tpu.memory_space<vmem>>, %arg6: memref<8x128xf32, #tpu.memory_space<vmem>>) attributes {dimension_semantics = [], scalar_prefetch = 0 : i64, scratch_operands = 0 : i64, tpu.core_type = #tpu.core_type<tc>} {
    %c0 = arith.constant 0 : index
    %c0_0 = arith.constant 0 : index
    %0 = vector.load %arg0[%c0, %c0_0] : memref<512x128xf32, #tpu.memory_space<vmem>>, vector<512x128xf32>
    %c0_1 = arith.constant 0 : index
    %c0_2 = arith.constant 0 : index
    %1 = vector.load %arg2[%c0_1, %c0_2] : memref<128x128xf32, #tpu.memory_space<vmem>>, vector<128x128xf32>
    %cst = arith.constant dense<0.000000e+00> : vector<512x128xf32>
    %2 = tpu.matmul %0, %1, %cst {dimension_numbers = #tpu.dot_dimension_numbers<[1], [0], [0], [1], [0, 0, 1, 1], [], []>} : vector<512x128xf32>, vector<128x128xf32>, vector<512x128xf32> -> vector<512x128xf32>
    %c0_3 = arith.constant 0 : index
    %c0_4 = arith.constant 0 : index
    %3 = vector.load %arg3[%c0_3, %c0_4] : memref<1x128xf32, #tpu.memory_space<vmem>>, vector<1x128xf32>
    %4 = vector.broadcast %3 : vector<1x128xf32> to vector<512x128xf32>
    %5 = arith.addf %2, %4 : vector<512x128xf32>
    %cst_5 = arith.constant 0.000000e+00 : f32
    %6 = vector.broadcast %cst_5 : f32 to vector<512x128xf32>
    %7 = arith.maximumf %5, %6 : vector<512x128xf32>
    %c0_6 = arith.constant 0 : index
    %c0_7 = arith.constant 0 : index
    %8 = vector.load %arg1[%c0_6, %c0_7] : memref<8x512xf32, #tpu.memory_space<vmem>>, vector<8x512xf32>
    %cst_8 = arith.constant dense<0.000000e+00> : vector<8x128xf32>
    %9 = tpu.matmul %8, %7, %cst_8 {dimension_numbers = #tpu.dot_dimension_numbers<[1], [0], [0], [1], [0, 0, 1, 1], [], []>} : vector<8x512xf32>, vector<512x128xf32>, vector<8x128xf32> -> vector<8x128xf32>
    %c0_9 = arith.constant 0 : index
    %c0_10 = arith.constant 0 : index
    %10 = vector.load %arg4[%c0_9, %c0_10] : memref<128x128xf32, #tpu.memory_space<vmem>>, vector<128x128xf32>
    %cst_11 = arith.constant dense<0.000000e+00> : vector<8x128xf32>
    %11 = tpu.matmul %9, %10, %cst_11 {dimension_numbers = #tpu.dot_dimension_numbers<[1], [0], [0], [1], [0, 0, 1, 1], [], []>} : vector<8x128xf32>, vector<128x128xf32>, vector<8x128xf32> -> vector<8x128xf32>
    %c0_12 = arith.constant 0 : index
    %c0_13 = arith.constant 0 : index
    %12 = vector.load %arg5[%c0_12, %c0_13] : memref<1x128xf32, #tpu.memory_space<vmem>>, vector<1x128xf32>
    %13 = vector.broadcast %12 : vector<1x128xf32> to vector<8x128xf32>
    %14 = arith.addf %11, %13 : vector<8x128xf32>
    %c0_14 = arith.constant 0 : index
    %c0_15 = arith.constant 0 : index
    %15 = vector.load %arg6[%c0_14, %c0_15] : memref<8x128xf32, #tpu.memory_space<vmem>>, vector<8x128xf32>
    tpu.vector_store %arg6[%c0_14, %c0_15], %14 {strides = array<i32>} : memref<8x128xf32, #tpu.memory_space<vmem>>, vector<8x128xf32>,
    return
  }
}

</mosaic_0001>

<llo_original>
// kernel: _model_forward.1
$region0: #{_model_forward.1}
  #allocation0 [shape = 'u32[]', space=smem, size = 0x4, offset = 0x4, fixed_abs, tag = 'smem constant byte address 0x4 - core index']
  #allocation1 [shape = 'u32[144,128]{1,0:T(1,128)}', space=vmem, size = 0x12000, scoped, tag = 'internal scratch']
  %s0 = inlined_call_operand.vmem [shape: f32[512,128], index: 0, kind: input, shape index: {}]
  %s1 = inlined_call_operand.vmem [shape: f32[8,512], index: 1, kind: input, shape index: {}]
  %s2 = inlined_call_operand.vmem [shape: f32[128,128], index: 2, kind: input, shape index: {}]
  %s3 = inlined_call_operand.vmem [shape: f32[1,128], index: 3, kind: input, shape index: {}]
  %s4 = inlined_call_operand.vmem [shape: f32[128,128], index: 4, kind: input, shape index: {}]
  %s5 = inlined_call_operand.vmem [shape: f32[1,128], index: 5, kind: input, shape index: {}]
  %s6 = inlined_call_operand.vmem [shape: f32[8,128], index: 6, kind: output, shape index: {}]
  %s7 = sld [smem:[#allocation0]]
  $region34: #{_model_forward.1} parent=0
    _
  %s9 = ssub.s32 1, %s7
  %s10 = scalar_select 0, %s9, %s7
  // Predicated region
  $region2: #{_model_forward.1} parent=0 // pred_check
    _
  $region3: #{_model_forward.1} parent=0 // pred_check_branch
    %12 = sbr.rel (0) target = $region5
  $region4: #{_model_forward.1} parent=0 // pred_region
    _
  $region5: #{_model_forward.1} parent=0 // pred_fallthru
    _
  // Predicated region
  $region6: #{_model_forward.1} parent=0 // pred_check
    _
  $region7: #{_model_forward.1} parent=0 // pred_check_branch
    %14 = sbr.rel (0) target = $region9
  $region8: #{_model_forward.1} parent=0 // pred_region
    _
  $region9: #{_model_forward.1} parent=0 // pred_fallthru
    _
  // Predicated region
  $region10: #{_model_forward.1} parent=0 // pred_check
    _
  $region11: #{_model_forward.1} parent=0 // pred_check_branch
    %16 = sbr.rel (0) target = $region13
  $region12: #{_model_forward.1} parent=0 // pred_region
    _
  $region13: #{_model_forward.1} parent=0 // pred_fallthru
    _
  // Predicated region
  $region14: #{_model_forward.1} parent=0 // pred_check
    _
  $region15: #{_model_forward.1} parent=0 // pred_check_branch
    %18 = sbr.rel (0) target = $region17
  $region16: #{_model_forward.1} parent=0 // pred_region
    _
  $region17: #{_model_forward.1} parent=0 // pred_fallthru
    _
  // Predicated region
  $region18: #{_model_forward.1} parent=0 // pred_check
    _
  $region19: #{_model_forward.1} parent=0 // pred_check_branch
    %20 = sbr.rel (0) target = $region21
  $region20: #{_model_forward.1} parent=0 // pred_region
    _
  $region21: #{_model_forward.1} parent=0 // pred_fallthru
    _
  // Predicated region
  $region22: #{_model_forward.1} parent=0 // pred_check
    _
  $region23: #{_model_forward.1} parent=0 // pred_check_branch
    %22 = sbr.rel (0) target = $region25
  $region24: #{_model_forward.1} parent=0 // pred_region
    _
  $region25: #{_model_forward.1} parent=0 // pred_fallthru
    _
  %v23 = vld [vmem:[%s0] sm:$0xff]
  %v24 = vld [vmem:[%s0 + $0x8] sm:$0xff]
  %v25 = vld [vmem:[%s0 + $0x10] sm:$0xff]
  %v26 = vld [vmem:[%s0 + $0x18] sm:$0xff]
  %v27 = vld [vmem:[%s0 + $0x20] sm:$0xff]
  %v28 = vld [vmem:[%s0 + $0x28] sm:$0xff]
  %v29 = vld [vmem:[%s0 + $0x30] sm:$0xff]
  %v30 = vld [vmem:[%s0 + $0x38] sm:$0xff]
  %v31 = vld [vmem:[%s0 + $0x40] sm:$0xff]
  %v32 = vld [vmem:[%s0 + $0x48] sm:$0xff]
  %v33 = vld [vmem:[%s0 + $0x50] sm:$0xff]
  %v34 = vld [vmem:[%s0 + $0x58] sm:$0xff]
  %v35 = vld [vmem:[%s0 + $0x60] sm:$0xff]
  %v36 = vld [vmem:[%s0 + $0x68] sm:$0xff]
  %v37 = vld [vmem:[%s0 + $0x70] sm:$0xff]
  %v38 = vld [vmem:[%s0 + $0x78] sm:$0xff]
  %v39 = vld [vmem:[%s0 + $0x80] sm:$0xff]
  %v40 = vld [vmem:[%s0 + $0x88] sm:$0xff]
  %v41 = vld [vmem:[%s0 + $0x90] sm:$0xff]
  %v42 = vld [vmem:[%s0 + $0x98] sm:$0xff]
  %v43 = vld [vmem:[%s0 + $0xa0] sm:$0xff]
  %v44 = vld [vmem:[%s0 + $0xa8] sm:$0xff]
  %v45 = vld [vmem:[%s0 + $0xb0] sm:$0xff]
  %v46 = vld [vmem:[%s0 + $0xb8] sm:$0xff]
  %v47 = vld [vmem:[%s0 + $0xc0] sm:$0xff]
  %v48 = vld [vmem:[%s0 + $0xc8] sm:$0xff]
  %v49 = vld [vmem:[%s0 + $0xd0] sm:$0xff]
  %v50 = vld [vmem:[%s0 + $0xd8] sm:$0xff]
  %v51 = vld [vmem:[%s0 + $0xe0] sm:$0xff]
  %v52 = vld [vmem:[%s0 + $0xe8] sm:$0xff]
  %v53 = vld [vmem:[%s0 + $0xf0] sm:$0xff]
  %v54 = vld [vmem:[%s0 + $0xf8] sm:$0xff]
  %v55 = vld [vmem:[%s0 + $0x100] sm:$0xff]
  %v56 = vld [vmem:[%s0 + $0x108] sm:$0xff]
  %v57 = vld [vmem:[%s0 + $0x110] sm:$0xff]
  %v58 = vld [vmem:[%s0 + $0x118] sm:$0xff]
  %v59 = vld [vmem:[%s0 + $0x120] sm:$0xff]
  %v60 = vld [vmem:[%s0 + $0x128] sm:$0xff]
  %v61 = vld [vmem:[%s0 + $0x130] sm:$0xff]
  %v62 = vld [vmem:[%s0 + $0x138] sm:$0xff]
  %v63 = vld [vmem:[%s0 + $0x140] sm:$0xff]
  %v64 = vld [vmem:[%s0 + $0x148] sm:$0xff]
  %v65 = vld [vmem:[%s0 + $0x150] sm:$0xff]
  %v66 = vld [vmem:[%s0 + $0x158] sm:$0xff]
  %v67 = vld [vmem:[%s0 + $0x160] sm:$0xff]
  %v68 = vld [vmem:[%s0 + $0x168] sm:$0xff]
  %v69 = vld [vmem:[%s0 + $0x170] sm:$0xff]
  %v70 = vld [vmem:[%s0 + $0x178] sm:$0xff]
  %v71 = vld [vmem:[%s0 + $0x180] sm:$0xff]
  %v72 = vld [vmem:[%s0 + $0x188] sm:$0xff]
  %v73 = vld [vmem:[%s0 + $0x190] sm:$0xff]
  %v74 = vld [vmem:[%s0 + $0x198] sm:$0xff]
  %v75 = vld [vmem:[%s0 + $0x1a0] sm:$0xff]
  %v76 = vld [vmem:[%s0 + $0x1a8] sm:$0xff]
  %v77 = vld [vmem:[%s0 + $0x1b0] sm:$0xff]
  %v78 = vld [vmem:[%s0 + $0x1b8] sm:$0xff]
  %v79 = vld [vmem:[%s0 + $0x1c0] sm:$0xff]
  %v80 = vld [vmem:[%s0 + $0x1c8] sm:$0xff]
  %v81 = vld [vmem:[%s0 + $0x1d0] sm:$0xff]
  %v82 = vld [vmem:[%s0 + $0x1d8] sm:$0xff]
  %v83 = vld [vmem:[%s0 + $0x1e0] sm:$0xff]
  %v84 = vld [vmem:[%s0 + $0x1e8] sm:$0xff]
  %v85 = vld [vmem:[%s0 + $0x1f0] sm:$0xff]
  %v86 = vld [vmem:[%s0 + $0x1f8] sm:$0xff]
  %v87 = vld [vmem:[%s2] sm:$0xff]
  %v88 = vld [vmem:[%s2 + $0x8] sm:$0xff]
  %v89 = vld [vmem:[%s2 + $0x10] sm:$0xff]
  %v90 = vld [vmem:[%s2 + $0x18] sm:$0xff]
  %v91 = vld [vmem:[%s2 + $0x20] sm:$0xff]
  %v92 = vld [vmem:[%s2 + $0x28] sm:$0xff]
  %v93 = vld [vmem:[%s2 + $0x30] sm:$0xff]
  %v94 = vld [vmem:[%s2 + $0x38] sm:$0xff]
  %v95 = vld [vmem:[%s2 + $0x40] sm:$0xff]
  %v96 = vld [vmem:[%s2 + $0x48] sm:$0xff]
  %v97 = vld [vmem:[%s2 + $0x50] sm:$0xff]
  %v98 = vld [vmem:[%s2 + $0x58] sm:$0xff]
  %v99 = vld [vmem:[%s2 + $0x60] sm:$0xff]
  %v100 = vld [vmem:[%s2 + $0x68] sm:$0xff]
  %v101 = vld [vmem:[%s2 + $0x70] sm:$0xff]
  %v102 = vld [vmem:[%s2 + $0x78] sm:$0xff]
  %v103 = vld [vmem:[%s3] sm:$0x1]
  %v105 = vlaneseq
  %v106 = vshrl.u32 %v105, 7
  %v107 = vsub.s32 0, %v106
  %v108 = vrot.slane %v103, %v107
  %110 = vmatprep.subr.mxu0 0.0
  %111 = vmatpush1.msra.mxu0 %v102
  %112 = vmatprep.subr.mxu0 0.0
  %113 = vmatpush1.msra.mxu0 %v101
  %114 = vmatprep.subr.mxu0 0.0
  %115 = vmatpush1.msra.mxu0 %v100
  %116 = vmatprep.subr.mxu0 0.0
  %117 = vmatpush1.msra.mxu0 %v99
  %118 = vmatprep.subr.mxu0 0.0
  %119 = vmatpush1.msra.mxu0 %v98
  %120 = vmatprep.subr.mxu0 0.0
  %121 = vmatpush1.msra.mxu0 %v97
  %122 = vmatprep.subr.mxu0 0.0
  %123 = vmatpush1.msra.mxu0 %v96
  %124 = vmatprep.subr.mxu0 0.0
  %125 = vmatpush1.msra.mxu0 %v95
  %126 = vmatprep.subr.mxu0 0.0
  %127 = vmatpush1.msra.mxu0 %v94
  %128 = vmatprep.subr.mxu0 0.0
  %129 = vmatpush1.msra.mxu0 %v93
  %130 = vmatprep.subr.mxu0 0.0
  %131 = vmatpush1.msra.mxu0 %v92
  %132 = vmatprep.subr.mxu0 0.0
  %133 = vmatpush1.msra.mxu0 %v91
  %134 = vmatprep.subr.mxu0 0.0
  %135 = vmatpush1.msra.mxu0 %v90
  %136 = vmatprep.subr.mxu0 0.0
  %137 = vmatpush1.msra.mxu0 %v89
  %138 = vmatprep.subr.mxu0 0.0
  %139 = vmatpush1.msra.mxu0 %v88
  %140 = vmatprep.subr.mxu0 0.0
  %141 = vmatpush1.msra.mxu0 %v87
  %142 = vmatprep.subr.mxu0 0.0
  %143 = vmatpush2.msra.mxu0 0.0
  %144 = vmatprep.subr.mxu0 0.0
  %145 = vmatpush2.msra.mxu0 0.0
  %146 = vmatprep.subr.mxu0 0.0
  %147 = vmatpush2.msra.mxu0 0.0
  %148 = vmatprep.subr.mxu0 0.0
  %149 = vmatpush2.msra.mxu0 0.0
  %150 = vmatprep.subr.mxu0 0.0
  %151 = vmatpush2.msra.mxu0 0.0
  %152 = vmatprep.subr.mxu0 0.0
  %153 = vmatpush2.msra.mxu0 0.0
  %154 = vmatprep.subr.mxu0 0.0
  %155 = vmatpush2.msra.mxu0 0.0
  %156 = vmatprep.subr.mxu0 0.0
  %157 = vmatpush2.msra.mxu0 0.0
  %158 = vmatprep.subr.mxu0 0.0
  %159 = vmatpush2.msra.mxu0 0.0
  %160 = vmatprep.subr.mxu0 0.0
  %161 = vmatpush2.msra.mxu0 0.0
  %162 = vmatprep.subr.mxu0 0.0
  %163 = vmatpush2.msra.mxu0 0.0
  %164 = vmatprep.subr.mxu0 0.0
  %165 = vmatpush2.msra.mxu0 0.0
  %166 = vmatprep.subr.mxu0 0.0
  %167 = vmatpush2.msra.mxu0 0.0
  %168 = vmatprep.subr.mxu0 0.0
  %169 = vmatpush2.msra.mxu0 0.0
  %170 = vmatprep.subr.mxu0 0.0
  %171 = vmatpush2.msra.mxu0 0.0
  %172 = vmatprep.subr.mxu0 0.0
  %173 = vmatpush2.msra.mxu0 0.0
  %174 = vmatprep.mubr.f32.mxu0 0.0
  %175 = vmatmul.mubr.f32.gmra.mxu0 %v23
  %v176 = vpop.f32.mrf.mxu0
  %v177 = vadd.f32 %v108, %v176
  %v178 = vpop.f32.mrf.mxu0
  %179 = vmatprep.mubr.f32.mxu0 0.0
  %180 = vmatmul.mubr.f32.gmra.mxu0 %v24
  %v181 = vpop.f32.mrf.mxu0
  %v182 = vadd.f32 %v108, %v181
  %v183 = vpop.f32.mrf.mxu0
  %184 = vmatprep.mubr.f32.mxu0 0.0
  %185 = vmatmul.mubr.f32.gmra.mxu0 %v25
  %v186 = vpop.f32.mrf.mxu0
  %v187 = vadd.f32 %v108, %v186
  %v188 = vpop.f32.mrf.mxu0
  %189 = vmatprep.mubr.f32.mxu0 0.0
  %190 = vmatmul.mubr.f32.gmra.mxu0 %v26
  %v191 = vpop.f32.mrf.mxu0
  %v192 = vadd.f32 %v108, %v191
  %v193 = vpop.f32.mrf.mxu0
  %194 = vmatprep.mubr.f32.mxu0 0.0
  %195 = vmatmul.mubr.f32.gmra.mxu0 %v27
  %v196 = vpop.f32.mrf.mxu0
  %v197 = vadd.f32 %v108, %v196
  %v198 = vpop.f32.mrf.mxu0
  %199 = vmatprep.mubr.f32.mxu0 0.0
  %200 = vmatmul.mubr.f32.gmra.mxu0 %v28
  %v201 = vpop.f32.mrf.mxu0
  %v202 = vadd.f32 %v108, %v201
  %v203 = vpop.f32.mrf.mxu0
  %204 = vmatprep.mubr.f32.mxu0 0.0
  %205 = vmatmul.mubr.f32.gmra.mxu0 %v29
  %v206 = vpop.f32.mrf.mxu0
  %v207 = vadd.f32 %v108, %v206
  %v208 = vpop.f32.mrf.mxu0
  %209 = vmatprep.mubr.f32.mxu0 0.0
  %210 = vmatmul.mubr.f32.gmra.mxu0 %v30
  %v211 = vpop.f32.mrf.mxu0
  %v212 = vadd.f32 %v108, %v211
  %v213 = vpop.f32.mrf.mxu0
  %214 = vmatprep.mubr.f32.mxu0 0.0
  %215 = vmatmul.mubr.f32.gmra.mxu0 %v31
  %v216 = vpop.f32.mrf.mxu0
  %v217 = vadd.f32 %v108, %v216
  %v218 = vpop.f32.mrf.mxu0
  %219 = vmatprep.mubr.f32.mxu0 0.0
  %220 = vmatmul.mubr.f32.gmra.mxu0 %v32
  %v221 = vpop.f32.mrf.mxu0
  %v222 = vadd.f32 %v108, %v221
  %v223 = vpop.f32.mrf.mxu0
  %224 = vmatprep.mubr.f32.mxu0 0.0
  %225 = vmatmul.mubr.f32.gmra.mxu0 %v33
  %v226 = vpop.f32.mrf.mxu0
  %v227 = vadd.f32 %v108, %v226
  %v228 = vpop.f32.mrf.mxu0
  %229 = vmatprep.mubr.f32.mxu0 0.0
  %230 = vmatmul.mubr.f32.gmra.mxu0 %v34
  %v231 = vpop.f32.mrf.mxu0
  %v232 = vadd.f32 %v108, %v231
  %v233 = vpop.f32.mrf.mxu0
  %234 = vmatprep.mubr.f32.mxu0 0.0
  %235 = vmatmul.mubr.f32.gmra.mxu0 %v35
  %v236 = vpop.f32.mrf.mxu0
  %v237 = vadd.f32 %v108, %v236
  %v238 = vpop.f32.mrf.mxu0
  %239 = vmatprep.mubr.f32.mxu0 0.0
  %240 = vmatmul.mubr.f32.gmra.mxu0 %v36
  %v241 = vpop.f32.mrf.mxu0
  %v242 = vadd.f32 %v108, %v241
  %v243 = vpop.f32.mrf.mxu0
  %244 = vmatprep.mubr.f32.mxu0 0.0
  %245 = vmatmul.mubr.f32.gmra.mxu0 %v37
  %v246 = vpop.f32.mrf.mxu0
  %v247 = vadd.f32 %v108, %v246
  %v248 = vpop.f32.mrf.mxu0
  %249 = vmatprep.mubr.f32.mxu0 0.0
  %250 = vmatmul.mubr.f32.gmra.mxu0 %v38
  %v251 = vpop.f32.mrf.mxu0
  %v252 = vadd.f32 %v108, %v251
  %v253 = vpop.f32.mrf.mxu0
  %254 = vmatprep.mubr.f32.mxu0 0.0
  %255 = vmatmul.mubr.f32.gmra.mxu0 %v39
  %v256 = vpop.f32.mrf.mxu0
  %v257 = vadd.f32 %v108, %v256
  %v258 = vpop.f32.mrf.mxu0
  %259 = vmatprep.mubr.f32.mxu0 0.0
  %260 = vmatmul.mubr.f32.gmra.mxu0 %v40
  %v261 = vpop.f32.mrf.mxu0
  %v262 = vadd.f32 %v108, %v261
  %v263 = vpop.f32.mrf.mxu0
  %264 = vmatprep.mubr.f32.mxu0 0.0
  %265 = vmatmul.mubr.f32.gmra.mxu0 %v41
  %v266 = vpop.f32.mrf.mxu0
  %v267 = vadd.f32 %v108, %v266
  %v268 = vpop.f32.mrf.mxu0
  %269 = vmatprep.mubr.f32.mxu0 0.0
  %270 = vmatmul.mubr.f32.gmra.mxu0 %v42
  %v271 = vpop.f32.mrf.mxu0
  %v272 = vadd.f32 %v108, %v271
  %v273 = vpop.f32.mrf.mxu0
  %274 = vmatprep.mubr.f32.mxu0 0.0
  %275 = vmatmul.mubr.f32.gmra.mxu0 %v43
  %v276 = vpop.f32.mrf.mxu0
  %v277 = vadd.f32 %v108, %v276
  %v278 = vpop.f32.mrf.mxu0
  %279 = vmatprep.mubr.f32.mxu0 0.0
  %280 = vmatmul.mubr.f32.gmra.mxu0 %v44
  %v281 = vpop.f32.mrf.mxu0
  %v282 = vadd.f32 %v108, %v281
  %v283 = vpop.f32.mrf.mxu0
  %284 = vmatprep.mubr.f32.mxu0 0.0
  %285 = vmatmul.mubr.f32.gmra.mxu0 %v45
  %v286 = vpop.f32.mrf.mxu0
  %v287 = vadd.f32 %v108, %v286
  %v288 = vpop.f32.mrf.mxu0
  %289 = vmatprep.mubr.f32.mxu0 0.0
  %290 = vmatmul.mubr.f32.gmra.mxu0 %v46
  %v291 = vpop.f32.mrf.mxu0
  %v292 = vadd.f32 %v108, %v291
  %v293 = vpop.f32.mrf.mxu0
  %294 = vmatprep.mubr.f32.mxu0 0.0
  %295 = vmatmul.mubr.f32.gmra.mxu0 %v47
  %v296 = vpop.f32.mrf.mxu0
  %v297 = vadd.f32 %v108, %v296
  %v298 = vpop.f32.mrf.mxu0
  %299 = vmatprep.mubr.f32.mxu0 0.0
  %300 = vmatmul.mubr.f32.gmra.mxu0 %v48
  %v301 = vpop.f32.mrf.mxu0
  %v302 = vadd.f32 %v108, %v301
  %v303 = vpop.f32.mrf.mxu0
  %304 = vmatprep.mubr.f32.mxu0 0.0
  %305 = vmatmul.mubr.f32.gmra.mxu0 %v49
  %v306 = vpop.f32.mrf.mxu0
  %v307 = vadd.f32 %v108, %v306
  %v308 = vpop.f32.mrf.mxu0
  %309 = vmatprep.mubr.f32.mxu0 0.0
  %310 = vmatmul.mubr.f32.gmra.mxu0 %v50
  %v311 = vpop.f32.mrf.mxu0
  %v312 = vadd.f32 %v108, %v311
  %v313 = vpop.f32.mrf.mxu0
  %314 = vmatprep.mubr.f32.mxu0 0.0
  %315 = vmatmul.mubr.f32.gmra.mxu0 %v51
  %v316 = vpop.f32.mrf.mxu0
  %v317 = vadd.f32 %v108, %v316
  %v318 = vpop.f32.mrf.mxu0
  %319 = vmatprep.mubr.f32.mxu0 0.0
  %320 = vmatmul.mubr.f32.gmra.mxu0 %v52
  %v321 = vpop.f32.mrf.mxu0
  %v322 = vadd.f32 %v108, %v321
  %v323 = vpop.f32.mrf.mxu0
  %324 = vmatprep.mubr.f32.mxu0 0.0
  %325 = vmatmul.mubr.f32.gmra.mxu0 %v53
  %v326 = vpop.f32.mrf.mxu0
  %v327 = vadd.f32 %v108, %v326
  %v328 = vpop.f32.mrf.mxu0
  %329 = vmatprep.mubr.f32.mxu0 0.0
  %330 = vmatmul.mubr.f32.gmra.mxu0 %v54
  %v331 = vpop.f32.mrf.mxu0
  %v332 = vadd.f32 %v108, %v331
  %v333 = vpop.f32.mrf.mxu0
  %334 = vmatprep.mubr.f32.mxu0 0.0
  %335 = vmatmul.mubr.f32.gmra.mxu0 %v55
  %v336 = vpop.f32.mrf.mxu0
  %v337 = vadd.f32 %v108, %v336
  %v338 = vpop.f32.mrf.mxu0
  %339 = vmatprep.mubr.f32.mxu0 0.0
  %340 = vmatmul.mubr.f32.gmra.mxu0 %v56
  %v341 = vpop.f32.mrf.mxu0
  %v342 = vadd.f32 %v108, %v341
  %v343 = vpop.f32.mrf.mxu0
  %344 = vmatprep.mubr.f32.mxu0 0.0
  %345 = vmatmul.mubr.f32.gmra.mxu0 %v57
  %v346 = vpop.f32.mrf.mxu0
  %v347 = vadd.f32 %v108, %v346
  %v348 = vpop.f32.mrf.mxu0
  %349 = vmatprep.mubr.f32.mxu0 0.0
  %350 = vmatmul.mubr.f32.gmra.mxu0 %v58
  %v351 = vpop.f32.mrf.mxu0
  %v352 = vadd.f32 %v108, %v351
  %v353 = vpop.f32.mrf.mxu0
  %354 = vmatprep.mubr.f32.mxu0 0.0
  %355 = vmatmul.mubr.f32.gmra.mxu0 %v59
  %v356 = vpop.f32.mrf.mxu0
  %v357 = vadd.f32 %v108, %v356
  %v358 = vpop.f32.mrf.mxu0
  %359 = vmatprep.mubr.f32.mxu0 0.0
  %360 = vmatmul.mubr.f32.gmra.mxu0 %v60
  %v361 = vpop.f32.mrf.mxu0
  %v362 = vadd.f32 %v108, %v361
  %v363 = vpop.f32.mrf.mxu0
  %364 = vmatprep.mubr.f32.mxu0 0.0
  %365 = vmatmul.mubr.f32.gmra.mxu0 %v61
  %v366 = vpop.f32.mrf.mxu0
  %v367 = vadd.f32 %v108, %v366
  %v368 = vpop.f32.mrf.mxu0
  %369 = vmatprep.mubr.f32.mxu0 0.0
  %370 = vmatmul.mubr.f32.gmra.mxu0 %v62
  %v371 = vpop.f32.mrf.mxu0
  %v372 = vadd.f32 %v108, %v371
  %v373 = vpop.f32.mrf.mxu0
  %374 = vmatprep.mubr.f32.mxu0 0.0
  %375 = vmatmul.mubr.f32.gmra.mxu0 %v63
  %v376 = vpop.f32.mrf.mxu0
  %v377 = vadd.f32 %v108, %v376
  %v378 = vpop.f32.mrf.mxu0
  %379 = vmatprep.mubr.f32.mxu0 0.0
  %380 = vmatmul.mubr.f32.gmra.mxu0 %v64
  %v381 = vpop.f32.mrf.mxu0
  %v382 = vadd.f32 %v108, %v381
  %v383 = vpop.f32.mrf.mxu0
  %384 = vmatprep.mubr.f32.mxu0 0.0
  %385 = vmatmul.mubr.f32.gmra.mxu0 %v65
  %v386 = vpop.f32.mrf.mxu0
  %v387 = vadd.f32 %v108, %v386
  %v388 = vpop.f32.mrf.mxu0
  %389 = vmatprep.mubr.f32.mxu0 0.0
  %390 = vmatmul.mubr.f32.gmra.mxu0 %v66
  %v391 = vpop.f32.mrf.mxu0
  %v392 = vadd.f32 %v108, %v391
  %v393 = vpop.f32.mrf.mxu0
  %394 = vmatprep.mubr.f32.mxu0 0.0
  %395 = vmatmul.mubr.f32.gmra.mxu0 %v67
  %v396 = vpop.f32.mrf.mxu0
  %v397 = vadd.f32 %v108, %v396
  %v398 = vpop.f32.mrf.mxu0
  %399 = vmatprep.mubr.f32.mxu0 0.0
  %400 = vmatmul.mubr.f32.gmra.mxu0 %v68
  %v401 = vpop.f32.mrf.mxu0
  %v402 = vadd.f32 %v108, %v401
  %v403 = vpop.f32.mrf.mxu0
  %404 = vmatprep.mubr.f32.mxu0 0.0
  %405 = vmatmul.mubr.f32.gmra.mxu0 %v69
  %v406 = vpop.f32.mrf.mxu0
  %v407 = vadd.f32 %v108, %v406
  %v408 = vpop.f32.mrf.mxu0
  %409 = vmatprep.mubr.f32.mxu0 0.0
  %410 = vmatmul.mubr.f32.gmra.mxu0 %v70
  %v411 = vpop.f32.mrf.mxu0
  %v412 = vadd.f32 %v108, %v411
  %v413 = vpop.f32.mrf.mxu0
  %414 = vmatprep.mubr.f32.mxu0 0.0
  %415 = vmatmul.mubr.f32.gmra.mxu0 %v71
  %v416 = vpop.f32.mrf.mxu0
  %v417 = vadd.f32 %v108, %v416
  %v418 = vpop.f32.mrf.mxu0
  %419 = vmatprep.mubr.f32.mxu0 0.0
  %420 = vmatmul.mubr.f32.gmra.mxu0 %v72
  %v421 = vpop.f32.mrf.mxu0
  %v422 = vadd.f32 %v108, %v421
  %v423 = vpop.f32.mrf.mxu0
  %424 = vmatprep.mubr.f32.mxu0 0.0
  %425 = vmatmul.mubr.f32.gmra.mxu0 %v73
  %v426 = vpop.f32.mrf.mxu0
  %v427 = vadd.f32 %v108, %v426
  %v428 = vpop.f32.mrf.mxu0
  %429 = vmatprep.mubr.f32.mxu0 0.0
  %430 = vmatmul.mubr.f32.gmra.mxu0 %v74
  %v431 = vpop.f32.mrf.mxu0
  %v432 = vadd.f32 %v108, %v431
  %v433 = vpop.f32.mrf.mxu0
  %434 = vmatprep.mubr.f32.mxu0 0.0
  %435 = vmatmul.mubr.f32.gmra.mxu0 %v75
  %v436 = vpop.f32.mrf.mxu0
  %v437 = vadd.f32 %v108, %v436
  %v438 = vpop.f32.mrf.mxu0
  %439 = vmatprep.mubr.f32.mxu0 0.0
  %440 = vmatmul.mubr.f32.gmra.mxu0 %v76
  %v441 = vpop.f32.mrf.mxu0
  %v442 = vadd.f32 %v108, %v441
  %v443 = vpop.f32.mrf.mxu0
  %444 = vmatprep.mubr.f32.mxu0 0.0
  %445 = vmatmul.mubr.f32.gmra.mxu0 %v77
  %v446 = vpop.f32.mrf.mxu0
  %v447 = vadd.f32 %v108, %v446
  %v448 = vpop.f32.mrf.mxu0
  %449 = vmatprep.mubr.f32.mxu0 0.0
  %450 = vmatmul.mubr.f32.gmra.mxu0 %v78
  %v451 = vpop.f32.mrf.mxu0
  %v452 = vadd.f32 %v108, %v451
  %v453 = vpop.f32.mrf.mxu0
  %454 = vmatprep.mubr.f32.mxu0 0.0
  %455 = vmatmul.mubr.f32.gmra.mxu0 %v79
  %v456 = vpop.f32.mrf.mxu0
  %v457 = vadd.f32 %v108, %v456
  %v458 = vpop.f32.mrf.mxu0
  %459 = vmatprep.mubr.f32.mxu0 0.0
  %460 = vmatmul.mubr.f32.gmra.mxu0 %v80
  %v461 = vpop.f32.mrf.mxu0
  %v462 = vadd.f32 %v108, %v461
  %v463 = vpop.f32.mrf.mxu0
  %464 = vmatprep.mubr.f32.mxu0 0.0
  %465 = vmatmul.mubr.f32.gmra.mxu0 %v81
  %v466 = vpop.f32.mrf.mxu0
  %v467 = vadd.f32 %v108, %v466
  %v468 = vpop.f32.mrf.mxu0
  %469 = vmatprep.mubr.f32.mxu0 0.0
  %470 = vmatmul.mubr.f32.gmra.mxu0 %v82
  %v471 = vpop.f32.mrf.mxu0
  %v472 = vadd.f32 %v108, %v471
  %v473 = vpop.f32.mrf.mxu0
  %474 = vmatprep.mubr.f32.mxu0 0.0
  %475 = vmatmul.mubr.f32.gmra.mxu0 %v83
  %v476 = vpop.f32.mrf.mxu0
  %v477 = vadd.f32 %v108, %v476
  %v478 = vpop.f32.mrf.mxu0
  %479 = vmatprep.mubr.f32.mxu0 0.0
  %480 = vmatmul.mubr.f32.gmra.mxu0 %v84
  %v481 = vpop.f32.mrf.mxu0
  %v482 = vadd.f32 %v108, %v481
  %v483 = vpop.f32.mrf.mxu0
  %484 = vmatprep.mubr.f32.mxu0 0.0
  %485 = vmatmul.mubr.f32.gmra.mxu0 %v85
  %v486 = vpop.f32.mrf.mxu0
  %v487 = vadd.f32 %v108, %v486
  %v488 = vpop.f32.mrf.mxu0
  %489 = vmatprep.mubr.f32.mxu0 0.0
  %490 = vmatmul.mubr.f32.gmra.mxu0 %v86
  %v491 = vpop.f32.mrf.mxu0
  %v492 = vadd.f32 %v108, %v491
  %v493 = vpop.f32.mrf.mxu0
  %494 = vdwg.mxu0
  %v495 = vmax.f32 %v177, 0.0
  %v496 = vmax.f32 %v182, 0.0
  %v497 = vmax.f32 %v187, 0.0
  %v498 = vmax.f32 %v192, 0.0
  %v499 = vmax.f32 %v197, 0.0
  %v500 = vmax.f32 %v202, 0.0
  %v501 = vmax.f32 %v207, 0.0
  %v502 = vmax.f32 %v212, 0.0
  %v503 = vmax.f32 %v217, 0.0
  %v504 = vmax.f32 %v222, 0.0
  %v505 = vmax.f32 %v227, 0.0
  %v506 = vmax.f32 %v232, 0.0
  %v507 = vmax.f32 %v237, 0.0
  %v508 = vmax.f32 %v242, 0.0
  %v509 = vmax.f32 %v247, 0.0
  %v510 = vmax.f32 %v252, 0.0
  %v511 = vmax.f32 %v257, 0.0
  %v512 = vmax.f32 %v262, 0.0
  %v513 = vmax.f32 %v267, 0.0
  %v514 = vmax.f32 %v272, 0.0
  %v515 = vmax.f32 %v277, 0.0
  %v516 = vmax.f32 %v282, 0.0
  %v517 = vmax.f32 %v287, 0.0
  %v518 = vmax.f32 %v292, 0.0
  %v519 = vmax.f32 %v297, 0.0
  %v520 = vmax.f32 %v302, 0.0
  %v521 = vmax.f32 %v307, 0.0
  %v522 = vmax.f32 %v312, 0.0
  %v523 = vmax.f32 %v317, 0.0
  %v524 = vmax.f32 %v322, 0.0
  %v525 = vmax.f32 %v327, 0.0
  %v526 = vmax.f32 %v332, 0.0
  %v527 = vmax.f32 %v337, 0.0
  %v528 = vmax.f32 %v342, 0.0
  %v529 = vmax.f32 %v347, 0.0
  %v530 = vmax.f32 %v352, 0.0
  %v531 = vmax.f32 %v357, 0.0
  %v532 = vmax.f32 %v362, 0.0
  %v533 = vmax.f32 %v367, 0.0
  %v534 = vmax.f32 %v372, 0.0
  %v535 = vmax.f32 %v377, 0.0
  %v536 = vmax.f32 %v382, 0.0
  %v537 = vmax.f32 %v387, 0.0
  %v538 = vmax.f32 %v392, 0.0
  %v539 = vmax.f32 %v397, 0.0
  %v540 = vmax.f32 %v402, 0.0
  %v541 = vmax.f32 %v407, 0.0
  %v542 = vmax.f32 %v412, 0.0
  %v543 = vmax.f32 %v417, 0.0
  %v544 = vmax.f32 %v422, 0.0
  %v545 = vmax.f32 %v427, 0.0
  %v546 = vmax.f32 %v432, 0.0
  %v547 = vmax.f32 %v437, 0.0
  %v548 = vmax.f32 %v442, 0.0
  %v549 = vmax.f32 %v447, 0.0
  %v550 = vmax.f32 %v452, 0.0
  %v551 = vmax.f32 %v457, 0.0
  %v552 = vmax.f32 %v462, 0.0
  %v553 = vmax.f32 %v467, 0.0
  %v554 = vmax.f32 %v472, 0.0
  %v555 = vmax.f32 %v477, 0.0
  %v556 = vmax.f32 %v482, 0.0
  %v557 = vmax.f32 %v487, 0.0
  %v558 = vmax.f32 %v492, 0.0
  %v559 = vld [vmem:[%s1] sm:$0xff]
  %v560 = vld [vmem:[%s1 + $0x8] sm:$0xff]
  %v561 = vld [vmem:[%s1 + $0x10] sm:$0xff]
  %v562 = vld [vmem:[%s1 + $0x18] sm:$0xff]
  %563 = vmatprep.subr.mxu0 0.0
  %564 = vmatpush1.msra.mxu0 %v510
  %565 = vmatprep.subr.mxu0 0.0
  %566 = vmatpush1.msra.mxu0 %v509
  %567 = vmatprep.subr.mxu0 0.0
  %568 = vmatpush1.msra.mxu0 %v508
  %569 = vmatprep.subr.mxu0 0.0
  %570 = vmatpush1.msra.mxu0 %v507
  %571 = vmatprep.subr.mxu0 0.0
  %572 = vmatpush1.msra.mxu0 %v506
  %573 = vmatprep.subr.mxu0 0.0
  %574 = vmatpush1.msra.mxu0 %v505
  %575 = vmatprep.subr.mxu0 0.0
  %576 = vmatpush1.msra.mxu0 %v504
  %577 = vmatprep.subr.mxu0 0.0
  %578 = vmatpush1.msra.mxu0 %v503
  %579 = vmatprep.subr.mxu0 0.0
  %580 = vmatpush1.msra.mxu0 %v502
  %581 = vmatprep.subr.mxu0 0.0
  %582 = vmatpush1.msra.mxu0 %v501
  %583 = vmatprep.subr.mxu0 0.0
  %584 = vmatpush1.msra.mxu0 %v500
  %585 = vmatprep.subr.mxu0 0.0
  %586 = vmatpush1.msra.mxu0 %v499
  %587 = vmatprep.subr.mxu0 0.0
  %588 = vmatpush1.msra.mxu0 %v498
  %589 = vmatprep.subr.mxu0 0.0
  %590 = vmatpush1.msra.mxu0 %v497
  %591 = vmatprep.subr.mxu0 0.0
  %592 = vmatpush1.msra.mxu0 %v496
  %593 = vmatprep.subr.mxu0 0.0
  %594 = vmatpush1.msra.mxu0 %v495
  %595 = vmatprep.subr.mxu0 0.0
  %596 = vmatpush2.msra.mxu0 %v526
  %597 = vmatprep.subr.mxu0 0.0
  %598 = vmatpush2.msra.mxu0 %v525
  %599 = vmatprep.subr.mxu0 0.0
  %600 = vmatpush2.msra.mxu0 %v524
  %601 = vmatprep.subr.mxu0 0.0
  %602 = vmatpush2.msra.mxu0 %v523
  %603 = vmatprep.subr.mxu0 0.0
  %604 = vmatpush2.msra.mxu0 %v522
  %605 = vmatprep.subr.mxu0 0.0
  %606 = vmatpush2.msra.mxu0 %v521
  %607 = vmatprep.subr.mxu0 0.0
  %608 = vmatpush2.msra.mxu0 %v520
  %609 = vmatprep.subr.mxu0 0.0
  %610 = vmatpush2.msra.mxu0 %v519
  %611 = vmatprep.subr.mxu0 0.0
  %612 = vmatpush2.msra.mxu0 %v518
  %613 = vmatprep.subr.mxu0 0.0
  %614 = vmatpush2.msra.mxu0 %v517
  %615 = vmatprep.subr.mxu0 0.0
  %616 = vmatpush2.msra.mxu0 %v516
  %617 = vmatprep.subr.mxu0 0.0
  %618 = vmatpush2.msra.mxu0 %v515
  %619 = vmatprep.subr.mxu0 0.0
  %620 = vmatpush2.msra.mxu0 %v514
  %621 = vmatprep.subr.mxu0 0.0
  %622 = vmatpush2.msra.mxu0 %v513
  %623 = vmatprep.subr.mxu0 0.0
  %624 = vmatpush2.msra.mxu0 %v512
  %625 = vmatprep.subr.mxu0 0.0
  %626 = vmatpush2.msra.mxu0 %v511
  %627 = vmatprep.mubr.f32.mxu0 %v560
  %628 = vmatmul.mubr.f32.gmra.mxu0 %v559
  %v629 = vpop.f32.mrf.mxu0
  %v630 = vadd.f32 0.0, %v629
  %v631 = vpop.f32.mrf.mxu0
  %632 = vdwg.mxu0
  %633 = vmatprep.subr.mxu0 0.0
  %634 = vmatpush1.msra.mxu0 %v542
  %635 = vmatprep.subr.mxu0 0.0
  %636 = vmatpush1.msra.mxu0 %v541
  %637 = vmatprep.subr.mxu0 0.0
  %638 = vmatpush1.msra.mxu0 %v540
  %639 = vmatprep.subr.mxu0 0.0
  %640 = vmatpush1.msra.mxu0 %v539
  %641 = vmatprep.subr.mxu0 0.0
  %642 = vmatpush1.msra.mxu0 %v538
  %643 = vmatprep.subr.mxu0 0.0
  %644 = vmatpush1.msra.mxu0 %v537
  %645 = vmatprep.subr.mxu0 0.0
  %646 = vmatpush1.msra.mxu0 %v536
  %647 = vmatprep.subr.mxu0 0.0
  %648 = vmatpush1.msra.mxu0 %v535
  %649 = vmatprep.subr.mxu0 0.0
  %650 = vmatpush1.msra.mxu0 %v534
  %651 = vmatprep.subr.mxu0 0.0
  %652 = vmatpush1.msra.mxu0 %v533
  %653 = vmatprep.subr.mxu0 0.0
  %654 = vmatpush1.msra.mxu0 %v532
  %655 = vmatprep.subr.mxu0 0.0
  %656 = vmatpush1.msra.mxu0 %v531
  %657 = vmatprep.subr.mxu0 0.0
  %658 = vmatpush1.msra.mxu0 %v530
  %659 = vmatprep.subr.mxu0 0.0
  %660 = vmatpush1.msra.mxu0 %v529
  %661 = vmatprep.subr.mxu0 0.0
  %662 = vmatpush1.msra.mxu0 %v528
  %663 = vmatprep.subr.mxu0 0.0
  %664 = vmatpush1.msra.mxu0 %v527
  %665 = vmatprep.subr.mxu0 0.0
  %666 = vmatpush2.msra.mxu0 %v558
  %667 = vmatprep.subr.mxu0 0.0
  %668 = vmatpush2.msra.mxu0 %v557
  %669 = vmatprep.subr.mxu0 0.0
  %670 = vmatpush2.msra.mxu0 %v556
  %671 = vmatprep.subr.mxu0 0.0
  %672 = vmatpush2.msra.mxu0 %v555
  %673 = vmatprep.subr.mxu0 0.0
  %674 = vmatpush2.msra.mxu0 %v554
  %675 = vmatprep.subr.mxu0 0.0
  %676 = vmatpush2.msra.mxu0 %v553
  %677 = vmatprep.subr.mxu0 0.0
  %678 = vmatpush2.msra.mxu0 %v552
  %679 = vmatprep.subr.mxu0 0.0
  %680 = vmatpush2.msra.mxu0 %v551
  %681 = vmatprep.subr.mxu0 0.0
  %682 = vmatpush2.msra.mxu0 %v550
  %683 = vmatprep.subr.mxu0 0.0
  %684 = vmatpush2.msra.mxu0 %v549
  %685 = vmatprep.subr.mxu0 0.0
  %686 = vmatpush2.msra.mxu0 %v548
  %687 = vmatprep.subr.mxu0 0.0
  %688 = vmatpush2.msra.mxu0 %v547
  %689 = vmatprep.subr.mxu0 0.0
  %690 = vmatpush2.msra.mxu0 %v546
  %691 = vmatprep.subr.mxu0 0.0
  %692 = vmatpush2.msra.mxu0 %v545
  %693 = vmatprep.subr.mxu0 0.0
  %694 = vmatpush2.msra.mxu0 %v544
  %695 = vmatprep.subr.mxu0 0.0
  %696 = vmatpush2.msra.mxu0 %v543
  %697 = vmatprep.mubr.f32.mxu0 %v562
  %698 = vmatmul.mubr.f32.gmra.mxu0 %v561
  %v699 = vpop.f32.mrf.mxu0
  %v700 = vadd.f32 %v630, %v699
  %v701 = vpop.f32.mrf.mxu0
  %702 = vdwg.mxu0
  %v703 = vld [vmem:[%s4] sm:$0xff]
  %v704 = vld [vmem:[%s4 + $0x8] sm:$0xff]
  %v705 = vld [vmem:[%s4 + $0x10] sm:$0xff]
  %v706 = vld [vmem:[%s4 + $0x18] sm:$0xff]
  %v707 = vld [vmem:[%s4 + $0x20] sm:$0xff]
  %v708 = vld [vmem:[%s4 + $0x28] sm:$0xff]
  %v709 = vld [vmem:[%s4 + $0x30] sm:$0xff]
  %v710 = vld [vmem:[%s4 + $0x38] sm:$0xff]
  %v711 = vld [vmem:[%s4 + $0x40] sm:$0xff]
  %v712 = vld [vmem:[%s4 + $0x48] sm:$0xff]
  %v713 = vld [vmem:[%s4 + $0x50] sm:$0xff]
  %v714 = vld [vmem:[%s4 + $0x58] sm:$0xff]
  %v715 = vld [vmem:[%s4 + $0x60] sm:$0xff]
  %v716 = vld [vmem:[%s4 + $0x68] sm:$0xff]
  %v717 = vld [vmem:[%s4 + $0x70] sm:$0xff]
  %v718 = vld [vmem:[%s4 + $0x78] sm:$0xff]
  %v719 = vld [vmem:[%s5] sm:$0x1]
  %v721 = vlaneseq
  %v722 = vshrl.u32 %v721, 7
  %v723 = vsub.s32 0, %v722
  %v724 = vrot.slane %v719, %v723
  %726 = vmatprep.subr.mxu0 0.0
  %727 = vmatpush1.msra.mxu0 %v718
  %728 = vmatprep.subr.mxu0 0.0
  %729 = vmatpush1.msra.mxu0 %v717
  %730 = vmatprep.subr.mxu0 0.0
  %731 = vmatpush1.msra.mxu0 %v716
  %732 = vmatprep.subr.mxu0 0.0
  %733 = vmatpush1.msra.mxu0 %v715
  %734 = vmatprep.subr.mxu0 0.0
  %735 = vmatpush1.msra.mxu0 %v714
  %736 = vmatprep.subr.mxu0 0.0
  %737 = vmatpush1.msra.mxu0 %v713
  %738 = vmatprep.subr.mxu0 0.0
  %739 = vmatpush1.msra.mxu0 %v712
  %740 = vmatprep.subr.mxu0 0.0
  %741 = vmatpush1.msra.mxu0 %v711
  %742 = vmatprep.subr.mxu0 0.0
  %743 = vmatpush1.msra.mxu0 %v710
  %744 = vmatprep.subr.mxu0 0.0
  %745 = vmatpush1.msra.mxu0 %v709
  %746 = vmatprep.subr.mxu0 0.0
  %747 = vmatpush1.msra.mxu0 %v708
  %748 = vmatprep.subr.mxu0 0.0
  %749 = vmatpush1.msra.mxu0 %v707
  %750 = vmatprep.subr.mxu0 0.0
  %751 = vmatpush1.msra.mxu0 %v706
  %752 = vmatprep.subr.mxu0 0.0
  %753 = vmatpush1.msra.mxu0 %v705
  %754 = vmatprep.subr.mxu0 0.0
  %755 = vmatpush1.msra.mxu0 %v704
  %756 = vmatprep.subr.mxu0 0.0
  %757 = vmatpush1.msra.mxu0 %v703
  %758 = vmatprep.subr.mxu0 0.0
  %759 = vmatpush2.msra.mxu0 0.0
  %760 = vmatprep.subr.mxu0 0.0
  %761 = vmatpush2.msra.mxu0 0.0
  %762 = vmatprep.subr.mxu0 0.0
  %763 = vmatpush2.msra.mxu0 0.0
  %764 = vmatprep.subr.mxu0 0.0
  %765 = vmatpush2.msra.mxu0 0.0
  %766 = vmatprep.subr.mxu0 0.0
  %767 = vmatpush2.msra.mxu0 0.0
  %768 = vmatprep.subr.mxu0 0.0
  %769 = vmatpush2.msra.mxu0 0.0
  %770 = vmatprep.subr.mxu0 0.0
  %771 = vmatpush2.msra.mxu0 0.0
  %772 = vmatprep.subr.mxu0 0.0
  %773 = vmatpush2.msra.mxu0 0.0
  %774 = vmatprep.subr.mxu0 0.0
  %775 = vmatpush2.msra.mxu0 0.0
  %776 = vmatprep.subr.mxu0 0.0
  %777 = vmatpush2.msra.mxu0 0.0
  %778 = vmatprep.subr.mxu0 0.0
  %779 = vmatpush2.msra.mxu0 0.0
  %780 = vmatprep.subr.mxu0 0.0
  %781 = vmatpush2.msra.mxu0 0.0
  %782 = vmatprep.subr.mxu0 0.0
  %783 = vmatpush2.msra.mxu0 0.0
  %784 = vmatprep.subr.mxu0 0.0
  %785 = vmatpush2.msra.mxu0 0.0
  %786 = vmatprep.subr.mxu0 0.0
  %787 = vmatpush2.msra.mxu0 0.0
  %788 = vmatprep.subr.mxu0 0.0
  %789 = vmatpush2.msra.mxu0 0.0
  %790 = vmatprep.mubr.f32.mxu0 0.0
  %791 = vmatmul.mubr.f32.gmra.mxu0 %v700
  %v792 = vpop.f32.mrf.mxu0
  %v793 = vadd.f32 %v724, %v792
  %v794 = vpop.f32.mrf.mxu0
  %795 = vdwg.mxu0
  %796 = vst [vmem:[%s6] sm:$0xff] %v793
  // Predicated region
  $region26: #{_model_forward.1} parent=0 // pred_check
    _
  $region27: #{_model_forward.1} parent=0 // pred_check_branch
    %798 = sbr.rel (0) target = $region29
  $region28: #{_model_forward.1} parent=0 // pred_region
    _
  $region29: #{_model_forward.1} parent=0 // pred_fallthru
    _
  // Predicated region
  $region30: #{_model_forward.1} parent=0 // pred_check
    _
  $region31: #{_model_forward.1} parent=0 // pred_check_branch
    %800 = sbr.rel (0) target = $region33
  $region32: #{_model_forward.1} parent=0 // pred_region
    _
  $region33: #{_model_forward.1} parent=0 // pred_fallthru
    _

</llo_original>
